<compile_context>
chip_gen: v7x
topology: tpu7x:2x2x1
jax: 0.10.0
libtpu: 0.0.40
codegen_flags: <defaults>
</compile_context>

<pallas_src>
import math

import jax
import jax.numpy as jnp
from jax.experimental import pallas as pl
from jax.experimental.pallas import tpu as pltpu

_LANE = 128
_SUBLANE = 8


def _copy_kernel(x_ref, o_ref):
    # Pure lane-dense identity copy of one tile.
    o_ref[...] = x_ref[...]


def _round_down(x, m):
    return (x // m) * m


def _round_up(x, m):
    return ((x + m - 1) // m) * m


def _select_budget():
    """Return (block_bytes, vmem_limit_bytes) sized per TPU generation.

    With in + out each double-buffered, live VMEM is ~4x block_bytes.
    """
    try:
        vmem = int(getattr(pltpu.get_tpu_info(), "vmem_capacity_bytes", 0))
    except Exception:  # pragma: no cover - defensive, keeps kernel runnable
        vmem = 0
    if vmem and vmem <= (64 << 20):
        # v7x: 64 MiB physical per TensorCore -> modest blocks, 32 MiB scope.
        return 4 << 20, 32 << 20
    if vmem:
        # v5e / v6e: 128 MiB physical -> bigger blocks; explicitly raise the
        # scoped limit (v5e's default scoped VMEM is only 16 MiB).
        return 8 << 20, 64 << 20
    # Unknown chip: conservative blocks that fit even v5e's 16 MiB default.
    return 3 << 20, None


def _tiled_copy_2d(x2: jax.Array, block_bytes: int, vmem_limit) -> jax.Array:
    """Lane-dense tiled identity copy of a 2-D array via pallas_call."""
    R, C = x2.shape
    itemsize = jnp.dtype(x2.dtype).itemsize

    # Lane (last) dim: multiple of 128, or the full extent when that is not
    # possible (both satisfy the (8, 128) BlockSpec rule).
    if C >= _LANE and C % _LANE == 0:
        tc = min(C, _round_down(max(_LANE, block_bytes // (_SUBLANE * itemsize)), _LANE))
    else:
        tc = C

    # Sublane (second-last) dim: multiple of 8 (or full extent), sized so one
    # block stays under the per-generation byte budget.
    row_budget = max(1, block_bytes // max(1, tc * itemsize))
    if R >= _SUBLANE:
        tr = max(_SUBLANE, _round_down(min(R, row_budget), _SUBLANE))
    else:
        tr = R

    # Expose >= 2 blocks along the parallel row axis when possible so both
    # v7x TensorCores participate.
    if R >= 2 * _SUBLANE and pl.cdiv(R, tr) < 2:
        tr = max(_SUBLANE, _round_up(pl.cdiv(R, 2), _SUBLANE))

    grid = (pl.cdiv(R, tr), pl.cdiv(C, tc))

    cp_kwargs = dict(dimension_semantics=("parallel", "parallel"))
    if vmem_limit is not None:
        cp_kwargs["vmem_limit_bytes"] = vmem_limit

    return pl.pallas_call(
        _copy_kernel,
        out_shape=jax.ShapeDtypeStruct((R, C), x2.dtype),
        grid_spec=pltpu.PrefetchScalarGridSpec(
            num_scalar_prefetch=0,
            grid=grid,
            in_specs=[pl.BlockSpec((tr, tc), lambda i, j: (i, j))],
            out_specs=pl.BlockSpec((tr, tc), lambda i, j: (i, j)),
        ),
        compiler_params=pltpu.CompilerParams(**cp_kwargs),
        cost_estimate=pl.CostEstimate(
            flops=0,
            transcendentals=0,
            bytes_accessed=2 * R * C * itemsize,
        ),
    )(x2)


def flatten(x: jax.Array) -> jax.Array:
    """Equivalent of torch `x.view(x.size(0), -1)` for any rank >= 1 input."""
    B = x.shape[0]
    F = int(math.prod(x.shape[1:]))
    N = B * F

    block_bytes, vmem_limit = _select_budget()

    if N % _LANE == 0:
        # Shape-agnostic lane-dense factorization of the flat contiguous
        # buffer: (rows, TF) with TF the largest nice multiple of 128 that
        # divides N.  All reshapes below are metadata-only.
        tf = _LANE
        for cand in (131072, 65536, 32768, 16384, 8192, 4096,
                     2048, 1024, 512, 256, 128):
            if N % cand == 0:
                tf = cand
                break
        rows = N // tf
        x2 = jnp.reshape(x, (rows, tf))
        y2 = _tiled_copy_2d(x2, block_bytes, vmem_limit)
        return jnp.reshape(y2, (B, F))

    # Fallback for totals not divisible by 128: copy at (B, F); ragged edges
    # are handled by Pallas masking (correct, slightly less lane-efficient).
    x2 = jnp.reshape(x, (B, F))
    return _tiled_copy_2d(x2, block_bytes, vmem_limit)


if __name__ == "__main__":
    key = jax.random.PRNGKey(0)
    B, C, H, W = 2, 4, 16, 16
    x = jax.random.normal(key, (B, C, H, W), dtype=jnp.float32)

    y = flatten(x)
    jax.block_until_ready(y)

    # correctness check against plain reshape (== torch .view(B, -1))
    y_ref = jnp.reshape(x, (B, -1))
    assert y.shape == (B, C * H * W), y.shape
    assert jnp.array_equal(y, y_ref), "mismatch vs reference reshape"

    print("KERNEL_OK")
</pallas_src>

<mosaic_0001>
module attributes {stable_mosaic.version = 11 : i64} {
  func.func @_copy_kernel(%arg0: i32, %arg1: i32, %arg2: memref<1x2048xf32, #tpu.memory_space<vmem>>, %arg3: memref<1x2048xf32, #tpu.memory_space<vmem>>) attributes {dimension_semantics = [#tpu.dimension_semantics<parallel>, #tpu.dimension_semantics<parallel>], iteration_bounds = array<i64: 1, 1>, scalar_prefetch = 0 : i64, scratch_operands = 0 : i64, tpu.core_type = #tpu.core_type<tc>, window_params = [{transform_indices = @transform_0, window_bounds = array<i64: 1, 2048>}, {transform_indices = @transform_1, window_bounds = array<i64: 1, 2048>}]} {
    %c0 = arith.constant 0 : index
    %c0_0 = arith.constant 0 : index
    %0 = vector.load %arg2[%c0, %c0_0] : memref<1x2048xf32, #tpu.memory_space<vmem>>, vector<1x2048xf32>
    %c0_1 = arith.constant 0 : index
    %c0_2 = arith.constant 0 : index
    %1 = vector.load %arg3[%c0_1, %c0_2] : memref<1x2048xf32, #tpu.memory_space<vmem>>, vector<1x2048xf32>
    tpu.vector_store %arg3[%c0_1, %c0_2], %0 {strides = array<i32>} : memref<1x2048xf32, #tpu.memory_space<vmem>>, vector<1x2048xf32>,
    return
  }
  func.func @transform_0(%arg0: i32, %arg1: i32) -> (i32, i32) {
    %c0_i32 = arith.constant 0 : i32
    return %arg0, %arg1 : i32, i32
  }
  func.func @transform_1(%arg0: i32, %arg1: i32) -> (i32, i32) {
    %c0_i32 = arith.constant 0 : i32
    return %arg0, %arg1 : i32, i32
  }
}

</mosaic_0001>

<llo_original>
// kernel: tpu_custom_call.1
$region0: #{tpu_custom_call.1}
  #allocation0 [shape = 'u32[]', space=smem, size = 0x4, offset = 0x4, fixed_abs, tag = 'smem constant byte address 0x4 - core index']
  #allocation1 [shape = 'u32[144,128]{1,0:T(1,128)}', space=vmem, size = 0x12000, scoped, tag = 'internal scratch']
  %s0 = inlined_call_operand.hbm [shape: f32[1,2048], index: 0, kind: input, shape index: {}]
  %s1 = inlined_call_operand.hbm [shape: f32[1,2048], index: 1, kind: output, shape index: {}]
  %s2 = sld [smem:[#allocation0]]
  $region18: #{tpu_custom_call.1} parent=0
    _
  %s4 = ssub.s32 1, %s2
  %s5 = scalar_select 0, %s4, %s2
  $region1: #{tpu_custom_call.1} parent=0
    #allocation2 [shape = 'u8[8192]{0}', space=vmem, size = 0x2000, scoped, tag = 'input window, operand 0, single buffered']
    #allocation3 [shape = 's32[1]{0}', space=sflag, size = 0x4, scoped, tag = 'scoped memory for tpu_custom_call.1']
    #allocation4 [shape = 's32[1]{0}', space=sflag, size = 0x4, scoped, tag = 'scoped memory for tpu_custom_call.1']
    #allocation5 [shape = 'u8[8192]{0}', space=vmem, size = 0x2000, scoped, tag = 'output window, operand 0, single buffered']
    %6 = vsyncpa [#allocation3], 0
    %7 = vsyncpa [#allocation4], 0
    // Predicated region
    $region2: #{tpu_custom_call.1} parent=1 // pred_check
      _
    $region3: #{tpu_custom_call.1} parent=1 // pred_check_branch
      %9 = sbr.rel (0) target = $region5
    $region4: #{tpu_custom_call.1} parent=1 // pred_region
      %s11 = ssub.s32 256, 256
      %12 = vsyncadd [#allocation3], %s11
      %s14 = sshll.u32 [#allocation2], 4
      %s15 = int_to_ptr.vmem [resolvable:$true] %s14
      %17 = dma.hbm_to_vmem [thread:$0]  %s0, 256, %s15, [#allocation3]
    $region5: #{tpu_custom_call.1} parent=1 // pred_fallthru
      _
    // Predicated region
    $region6: #{tpu_custom_call.1} parent=1 // pred_check
      _
    $region7: #{tpu_custom_call.1} parent=1 // pred_check_branch
      %19 = sbr.rel (0) target = $region9
    $region8: #{tpu_custom_call.1} parent=1 // pred_region
      %20 = dma.done [#allocation3], 256
    $region9: #{tpu_custom_call.1} parent=1 // pred_fallthru
      _
    %v21 = vld [vmem:[#allocation2] sm:$0xff]
    %v22 = vld [vmem:[#allocation2 + $0x8] sm:$0xff]
    %23 = vst [vmem:[#allocation5] sm:$0xff] %v21
    %24 = vst [vmem:[#allocation5 + $0x8] sm:$0xff] %v22
    // Predicated region
    $region10: #{tpu_custom_call.1} parent=1 // pred_check
      _
    $region11: #{tpu_custom_call.1} parent=1 // pred_check_branch
      %26 = sbr.rel (0) target = $region13
    $region12: #{tpu_custom_call.1} parent=1 // pred_region
      %s28 = ssub.s32 256, 256
      %29 = vsyncadd [#allocation4], %s28
      %s31 = sshll.u32 [#allocation5], 4
      %s32 = int_to_ptr.vmem [resolvable:$true] %s31
      %34 = dma.vmem_to_hbm [thread:$0]  %s32, 256, %s1, [#allocation4]
    $region13: #{tpu_custom_call.1} parent=1 // pred_fallthru
      _
    // Predicated region
    $region14: #{tpu_custom_call.1} parent=1 // pred_check
      _
    $region15: #{tpu_custom_call.1} parent=1 // pred_check_branch
      %36 = sbr.rel (0) target = $region17
    $region16: #{tpu_custom_call.1} parent=1 // pred_region
      %37 = dma.done [#allocation4], 256
    $region17: #{tpu_custom_call.1} parent=1 // pred_fallthru
      _
    %38 = vsyncpa [#allocation3], 1
    %39 = vsyncpa [#allocation4], 1

</llo_original>
